<compile_context>
chip_gen: v6e
topology: v6e:2x2x1
jax: 0.10.0
libtpu: 0.0.40
codegen_flags: <defaults>
</compile_context>

<pallas_src>
import functools

import jax
import jax.numpy as jnp
from jax.experimental import pallas as pl
from jax.experimental.pallas import tpu as pltpu


_DEFAULT_TILE_ROWS = 256  # sweep 256-1024; keep a multiple of 128 (MXU) and of 8 (f32 sublanes)


def _make_const_pipeline_mode():
    try:
        return pl.Buffered(1)   # single-buffer blocks whose index map is constant
    except Exception:           # pragma: no cover - older jax without pl.Buffered
        return None


_CONST_PIPELINE = {"mode": _make_const_pipeline_mode()}


def _const_spec(block_shape, index_map):
    """BlockSpec for grid-invariant operands (weights/LN params): single-buffered if possible."""
    mode = _CONST_PIPELINE["mode"]
    if mode is not None:
        try:
            return pl.BlockSpec(block_shape, index_map, pipeline_mode=mode)
        except TypeError:       # BlockSpec without pipeline_mode support
            _CONST_PIPELINE["mode"] = None
    return pl.BlockSpec(block_shape, index_map)


def _round_up(x, m):
    return (x + m - 1) // m * m


def _pick_tile(m, tile_rows):
    # Use the requested (large) tile; only shrink for toy problems smaller than one tile.
    return min(tile_rows, _round_up(m, 8))


# ---------------------------------------------------------------------------
# Kernels
# ---------------------------------------------------------------------------

def _ln_matmul_kernel(x_ref, gamma_ref, beta_ref, w_ref, b_ref, out_ref, *, eps):
    # x: (tm, C) row tile; gamma/beta: (1, C) f32; w: (C, H) native dtype; b: (1, H) f32.
    x = x_ref[...].astype(jnp.float32)
    mean = jnp.mean(x, axis=-1, keepdims=True)
    centered = x - mean
    var = jnp.mean(centered * centered, axis=-1, keepdims=True)
    norm = centered * jax.lax.rsqrt(var + eps)
    norm = norm * gamma_ref[...] + beta_ref[...]
    w = w_ref[...]
    # Feed the MXU in the weight's native dtype (no per-step f32 upcast of the resident weight).
    acc = jnp.dot(norm.astype(w.dtype), w, preferred_element_type=jnp.float32)
    acc = acc + b_ref[...]
    out_ref[...] = acc.astype(out_ref.dtype)


def _matmul_residual_kernel(x_ref, w_ref, b_ref, res_ref, out_ref):
    # out = residual + x @ W + b, accumulated in f32 on the MXU.
    w = w_ref[...]
    acc = jnp.dot(x_ref[...].astype(w.dtype), w, preferred_element_type=jnp.float32)
    acc = acc + b_ref[...] + res_ref[...].astype(jnp.float32)
    out_ref[...] = acc.astype(out_ref.dtype)


def _layernorm_kernel(x_ref, gamma_ref, beta_ref, out_ref, *, eps):
    x = x_ref[...].astype(jnp.float32)
    mean = jnp.mean(x, axis=-1, keepdims=True)
    centered = x - mean
    var = jnp.mean(centered * centered, axis=-1, keepdims=True)
    y = centered * jax.lax.rsqrt(var + eps) * gamma_ref[...] + beta_ref[...]
    out_ref[...] = y.astype(out_ref.dtype)


# ---------------------------------------------------------------------------
# Wrappers
# ---------------------------------------------------------------------------

def layernorm_linear(x2d, gamma, beta, w, b, *, eps=1e-5,
                     tile_rows=_DEFAULT_TILE_ROWS, vmem_limit_bytes=None):
    """y = LayerNorm(x) @ W + b   with x2d: (M, C), W: (C, H)."""
    M, C = x2d.shape
    H = w.shape[1]
    out_dtype = x2d.dtype

    tm = _pick_tile(M, tile_rows)
    m_pad = _round_up(M, tm)
    x_p = jnp.pad(x2d, ((0, m_pad - M), (0, 0))) if m_pad != M else x2d

    # Pre-cast the small resident params once (outside the kernel / grid loop).
    gamma2d = gamma.reshape(1, C).astype(jnp.float32)
    beta2d = beta.reshape(1, C).astype(jnp.float32)
    b2d = b.reshape(1, H).astype(jnp.float32)

    itemsize = jnp.dtype(out_dtype).itemsize
    cost = pl.CostEstimate(
        flops=2 * m_pad * C * H,
        transcendentals=0,
        bytes_accessed=(m_pad * C + m_pad * H) * itemsize
        + C * H * jnp.dtype(w.dtype).itemsize)

    out = pl.pallas_call(
        functools.partial(_ln_matmul_kernel, eps=eps),
        out_shape=jax.ShapeDtypeStruct((m_pad, H), out_dtype),
        grid_spec=pltpu.PrefetchScalarGridSpec(
            num_scalar_prefetch=0,
            grid=(m_pad // tm,),
            in_specs=[
                pl.BlockSpec((tm, C), lambda i: (i, 0)),      # activations (tiled rows)
                _const_spec((1, C), lambda i: (0, 0)),        # LN gamma
                _const_spec((1, C), lambda i: (0, 0)),        # LN beta
                _const_spec((C, H), lambda i: (0, 0)),        # projection weight (resident)
                _const_spec((1, H), lambda i: (0, 0)),        # projection bias
            ],
            out_specs=pl.BlockSpec((tm, H), lambda i: (i, 0)),
        ),
        compiler_params=pltpu.CompilerParams(
            dimension_semantics=("parallel",),                # megacore-shardable on v7x
            vmem_limit_bytes=vmem_limit_bytes),
        cost_estimate=cost,
    )(x_p, gamma2d, beta2d, w, b2d)
    return out[:M]


def linear_residual(x2d, w, b, res2d, *, tile_rows=_DEFAULT_TILE_ROWS, vmem_limit_bytes=None):
    """y = res + x @ W + b   with x2d: (M, Cin), W: (Cin, H), res2d: (M, H)."""
    M, Cin = x2d.shape
    H = w.shape[1]
    out_dtype = res2d.dtype

    tm = _pick_tile(M, tile_rows)
    m_pad = _round_up(M, tm)
    if m_pad != M:
        x2d = jnp.pad(x2d, ((0, m_pad - M), (0, 0)))
        res2d = jnp.pad(res2d, ((0, m_pad - M), (0, 0)))
    b2d = b.reshape(1, H).astype(jnp.float32)

    itemsize = jnp.dtype(out_dtype).itemsize
    cost = pl.CostEstimate(
        flops=2 * m_pad * Cin * H,
        transcendentals=0,
        bytes_accessed=(m_pad * Cin + 2 * m_pad * H) * itemsize
        + Cin * H * jnp.dtype(w.dtype).itemsize)

    out = pl.pallas_call(
        _matmul_residual_kernel,
        out_shape=jax.ShapeDtypeStruct((m_pad, H), out_dtype),
        grid_spec=pltpu.PrefetchScalarGridSpec(
            num_scalar_prefetch=0,
            grid=(m_pad // tm,),
            in_specs=[
                pl.BlockSpec((tm, Cin), lambda i: (i, 0)),
                _const_spec((Cin, H), lambda i: (0, 0)),
                _const_spec((1, H), lambda i: (0, 0)),
                pl.BlockSpec((tm, H), lambda i: (i, 0)),      # residual (tiled like output)
            ],
            out_specs=pl.BlockSpec((tm, H), lambda i: (i, 0)),
        ),
        compiler_params=pltpu.CompilerParams(
            dimension_semantics=("parallel",),
            vmem_limit_bytes=vmem_limit_bytes),
        cost_estimate=cost,
    )(x2d, w, b2d, res2d)
    return out[:M]


def layernorm(x2d, gamma, beta, *, eps=1e-5, tile_rows=_DEFAULT_TILE_ROWS):
    M, C = x2d.shape
    out_dtype = x2d.dtype
    tm = _pick_tile(M, tile_rows)
    m_pad = _round_up(M, tm)
    x_p = jnp.pad(x2d, ((0, m_pad - M), (0, 0))) if m_pad != M else x2d
    gamma2d = gamma.reshape(1, C).astype(jnp.float32)
    beta2d = beta.reshape(1, C).astype(jnp.float32)

    itemsize = jnp.dtype(out_dtype).itemsize
    cost = pl.CostEstimate(flops=8 * m_pad * C, transcendentals=m_pad,
                           bytes_accessed=2 * m_pad * C * itemsize)

    out = pl.pallas_call(
        functools.partial(_layernorm_kernel, eps=eps),
        out_shape=jax.ShapeDtypeStruct((m_pad, C), out_dtype),
        grid_spec=pltpu.PrefetchScalarGridSpec(
            num_scalar_prefetch=0,
            grid=(m_pad // tm,),
            in_specs=[
                pl.BlockSpec((tm, C), lambda i: (i, 0)),
                _const_spec((1, C), lambda i: (0, 0)),
                _const_spec((1, C), lambda i: (0, 0)),
            ],
            out_specs=pl.BlockSpec((tm, C), lambda i: (i, 0)),
        ),
        compiler_params=pltpu.CompilerParams(dimension_semantics=("parallel",)),
        cost_estimate=cost,
    )(x_p, gamma2d, beta2d)
    return out[:M]


# ---------------------------------------------------------------------------
# Non-kernel pieces (plain JAX)
# ---------------------------------------------------------------------------

def _pos_conv_embed(x, conv_w, conv_b, *, kernel_size, groups):
    # TODO(synk): grouped positional Conv1d kept in plain JAX (no Pallas grouped-conv kernel);
    # the weight-norm parametrization is folded into the effective conv weight.
    x_nct = jnp.transpose(x, (0, 2, 1)).astype(jnp.float32)
    pad = kernel_size // 2
    y = jax.lax.conv_general_dilated(
        x_nct, conv_w.astype(jnp.float32),
        window_strides=(1,), padding=[(pad, pad)],
        dimension_numbers=("NCH", "OIH", "NCH"),
        feature_group_count=groups)
    y = y + conv_b.astype(jnp.float32)[None, :, None]
    if kernel_size % 2 == 0:
        y = y[:, :, :-1]            # Wav2Vec2SamePadLayer
    y = jax.nn.gelu(y, approximate=False)
    return jnp.transpose(y, (0, 2, 1)).astype(x.dtype)


def _attention_core(q, k, v, num_heads):
    # TODO(synk): softmax attention core left in plain JAX (a flash-attention Pallas kernel
    # would replace this for long sequences); attention_mask is not supported here.
    B, S, C = q.shape
    hd = C // num_heads

    def split(t):
        return t.reshape(B, S, num_heads, hd).transpose(0, 2, 1, 3)

    qh, kh, vh = split(q), split(k), split(v)
    qh = qh * (hd ** -0.5)
    scores = jnp.einsum("bhqd,bhkd->bhqk", qh, kh)
    probs = jax.nn.softmax(scores.astype(jnp.float32), axis=-1).astype(v.dtype)
    ctx = jnp.einsum("bhqk,bhkd->bhqd", probs, vh)
    return ctx.transpose(0, 2, 1, 3).reshape(B, S, C)


# ---------------------------------------------------------------------------
# Encoder forward (Pallas path)
# ---------------------------------------------------------------------------

def wav2vec2_encoder_stable_layer_norm(params, hidden_states, *, num_heads,
                                       conv_kernel, conv_groups, eps=1e-5,
                                       tile_rows=_DEFAULT_TILE_ROWS):
    B, S, C = hidden_states.shape
    M = B * S

    pos = _pos_conv_embed(hidden_states, params["pos_conv_w"], params["pos_conv_b"],
                          kernel_size=conv_kernel, groups=conv_groups)
    x = hidden_states + pos          # encoder dropout: eval-mode identity

    for layer in params["layers"]:
        x2d = x.reshape(M, C)

        # --- attention block (stable layer norm = pre-LN), packed QKV projection ---
        qkv = layernorm_linear(x2d, layer["ln1_g"], layer["ln1_b"],
                               layer["w_qkv"], layer["b_qkv"],
                               eps=eps, tile_rows=tile_rows)
        q, k, v = jnp.split(qkv.reshape(B, S, 3 * C), 3, axis=-1)
        ctx = _attention_core(q, k, v, num_heads)
        x2d = linear_residual(ctx.reshape(M, C), layer["w_o"], layer["b_o"], x2d,
                              tile_rows=tile_rows)

        # --- feed-forward block (pre-LN) ---
        h = layernorm_linear(x2d, layer["ln2_g"], layer["ln2_b"],
                             layer["w_ff1"], layer["b_ff1"],
                             eps=eps, tile_rows=tile_rows)
        h = jax.nn.gelu(h, approximate=False)   # exact (erf) gelu, applied outside the kernel
        x2d = linear_residual(h, layer["w_ff2"], layer["b_ff2"], x2d,
                              tile_rows=tile_rows)
        x = x2d.reshape(B, S, C)

    # StableLayerNorm variant: final LayerNorm applied after all layers.
    x2d = layernorm(x.reshape(M, C), params["ln_f_g"], params["ln_f_b"],
                    eps=eps, tile_rows=tile_rows)
    return x2d.reshape(B, S, C)


# ---------------------------------------------------------------------------
# Pure-JAX reference
# ---------------------------------------------------------------------------

def _ln_ref(x, g, b, eps):
    x = x.astype(jnp.float32)
    m = jnp.mean(x, -1, keepdims=True)
    v = jnp.mean((x - m) ** 2, -1, keepdims=True)
    return (x - m) * jax.lax.rsqrt(v + eps) * g + b


def _reference(params, hidden_states, *, num_heads, conv_kernel, conv_groups, eps=1e-5):
    pos = _pos_conv_embed(hidden_states, params["pos_conv_w"], params["pos_conv_b"],
                          kernel_size=conv_kernel, groups=conv_groups)
    x = hidden_states.astype(jnp.float32) + pos
    for layer in params["layers"]:
        n = _ln_ref(x, layer["ln1_g"], layer["ln1_b"], eps)
        qkv = n @ layer["w_qkv"] + layer["b_qkv"]
        q, k, v = jnp.split(qkv, 3, axis=-1)
        ctx = _attention_core(q, k, v, num_heads)
        x = x + ctx @ layer["w_o"] + layer["b_o"]
        n = _ln_ref(x, layer["ln2_g"], layer["ln2_b"], eps)
        h = jax.nn.gelu(n @ layer["w_ff1"] + layer["b_ff1"], approximate=False)
        x = x + h @ layer["w_ff2"] + layer["b_ff2"]
    return _ln_ref(x, params["ln_f_g"], params["ln_f_b"], eps)


# ---------------------------------------------------------------------------
# Parameter init (deterministic, synthetic; not a checkpoint load)
# ---------------------------------------------------------------------------

def _init_params(key, *, hidden, intermediate, num_layers, conv_kernel, conv_groups):
    C, I = hidden, intermediate
    keys = jax.random.split(key, 2 + num_layers)

    def dense(k, shape, fan_in):
        return jax.random.normal(k, shape, dtype=jnp.float32) / jnp.sqrt(fan_in)

    def ln(k, n):
        k1, k2 = jax.random.split(k)
        return (1.0 + 0.1 * jax.random.normal(k1, (n,), jnp.float32),
                0.1 * jax.random.normal(k2, (n,), jnp.float32))

    kc1, kc2 = jax.random.split(keys[0])
    params = {
        "pos_conv_w": dense(kc1, (C, C // conv_groups, conv_kernel),
                            (C // conv_groups) * conv_kernel),
        "pos_conv_b": 0.1 * jax.random.normal(kc2, (C,), jnp.float32),
        "layers": [],
    }
    params["ln_f_g"], params["ln_f_b"] = ln(keys[1], C)

    for li in range(num_layers):
        ks = jax.random.split(keys[2 + li], 10)
        g1, b1 = ln(ks[0], C)
        g2, b2 = ln(ks[1], C)
        params["layers"].append({
            "ln1_g": g1, "ln1_b": b1,
            "w_qkv": dense(ks[2], (C, 3 * C), C),
            "b_qkv": 0.02 * jax.random.normal(ks[3], (3 * C,), jnp.float32),
            "w_o": dense(ks[4], (C, C), C),
            "b_o": 0.02 * jax.random.normal(ks[5], (C,), jnp.float32),
            "ln2_g": g2, "ln2_b": b2,
            "w_ff1": dense(ks[6], (C, I), C),
            "b_ff1": 0.02 * jax.random.normal(ks[7], (I,), jnp.float32),
            "w_ff2": dense(ks[8], (I, C), I),
            "b_ff2": 0.02 * jax.random.normal(ks[9], (C,), jnp.float32),
        })
    return params


if __name__ == "__main__":
    # Small but lane-dense config: hidden=128, 3*hidden=384, intermediate=256 (all multiples
    # of 128 -> unmasked wide stores), 4 heads, 2 layers, even conv kernel (SamePad removes 1).
    B, S, C, I = 2, 32, 128, 256
    NUM_HEADS, NUM_LAYERS = 4, 2
    CONV_K, CONV_G = 4, 8
    EPS = 1e-5

    key = jax.random.PRNGKey(0)
    k_x, k_p = jax.random.split(key)
    hidden_states = jax.random.normal(k_x, (B, S, C), dtype=jnp.float32)
    params = _init_params(k_p, hidden=C, intermediate=I, num_layers=NUM_LAYERS,
                          conv_kernel=CONV_K, conv_groups=CONV_G)

    run = functools.partial(wav2vec2_encoder_stable_layer_norm, params, hidden_states,
                            num_heads=NUM_HEADS, conv_kernel=CONV_K, conv_groups=CONV_G,
                            eps=EPS)
    try:
        out = jax.block_until_ready(run())
    except Exception:
        # Fall back to default double-buffered constant operands if single-buffering
        # (pl.Buffered(1)) is not supported by this jax/libtpu build.
        _CONST_PIPELINE["mode"] = None
        out = jax.block_until_ready(run())

    ref = _reference(params, hidden_states, num_heads=NUM_HEADS,
                     conv_kernel=CONV_K, conv_groups=CONV_G, eps=EPS)

    assert out.shape == (B, S, C)
    assert bool(jnp.all(jnp.isfinite(out)))
    max_err = float(jnp.max(jnp.abs(out.astype(jnp.float32) - ref)))
    assert jnp.allclose(out.astype(jnp.float32), ref, atol=2e-3, rtol=2e-3), max_err

    print("KERNEL_OK")
</pallas_src>

<mosaic_0001>
module attributes {stable_mosaic.version = 11 : i64} {
  func.func @_ln_matmul_kernel(%arg0: i32, %arg1: memref<64x128xf32, #tpu.memory_space<vmem>>, %arg2: memref<1x128xf32, #tpu.memory_space<vmem>>, %arg3: memref<1x128xf32, #tpu.memory_space<vmem>>, %arg4: memref<128x384xf32, #tpu.memory_space<vmem>>, %arg5: memref<1x384xf32, #tpu.memory_space<vmem>>, %arg6: memref<64x384xf32, #tpu.memory_space<vmem>>) attributes {dimension_semantics = [#tpu.dimension_semantics<parallel>], iteration_bounds = array<i64: 1>, scalar_prefetch = 0 : i64, scratch_operands = 0 : i64, tpu.core_type = #tpu.core_type<tc>, window_params = [{transform_indices = @transform_0, window_bounds = array<i64: 64, 128>}, {pipeline_mode = #tpu.pipeline_mode<synchronous>, transform_indices = @transform_1, window_bounds = array<i64: 1, 128>}, {pipeline_mode = #tpu.pipeline_mode<synchronous>, transform_indices = @transform_2, window_bounds = array<i64: 1, 128>}, {pipeline_mode = #tpu.pipeline_mode<synchronous>, transform_indices = @transform_3, window_bounds = array<i64: 128, 384>}, {pipeline_mode = #tpu.pipeline_mode<synchronous>, transform_indices = @transform_4, window_bounds = array<i64: 1, 384>}, {transform_indices = @transform_5, window_bounds = array<i64: 64, 384>}]} {
    %c0 = arith.constant 0 : index
    %c0_0 = arith.constant 0 : index
    %0 = vector.load %arg1[%c0, %c0_0] : memref<64x128xf32, #tpu.memory_space<vmem>>, vector<64x128xf32>
    %cst = arith.constant dense<0.000000e+00> : vector<64xf32>
    %1 = vector.multi_reduction <add>, %0, %cst [1] : vector<64x128xf32> to vector<64xf32>
    %2 = vector.shape_cast %1 : vector<64xf32> to vector<64x1xf32>
    %cst_1 = arith.constant 1.280000e+02 : f32
    %3 = vector.broadcast %cst_1 : f32 to vector<64x1xf32>
    %4 = arith.divf %2, %3 : vector<64x1xf32>
    %5 = vector.broadcast %4 : vector<64x1xf32> to vector<64x128xf32>
    %6 = arith.subf %0, %5 : vector<64x128xf32>
    %7 = arith.mulf %6, %6 : vector<64x128xf32>
    %cst_2 = arith.constant dense<0.000000e+00> : vector<64xf32>
    %8 = vector.multi_reduction <add>, %7, %cst_2 [1] : vector<64x128xf32> to vector<64xf32>
    %9 = vector.shape_cast %8 : vector<64xf32> to vector<64x1xf32>
    %cst_3 = arith.constant 1.280000e+02 : f32
    %10 = vector.broadcast %cst_3 : f32 to vector<64x1xf32>
    %11 = arith.divf %9, %10 : vector<64x1xf32>
    %cst_4 = arith.constant 9.99999974E-6 : f32
    %12 = vector.broadcast %cst_4 : f32 to vector<64x1xf32>
    %13 = arith.addf %11, %12 : vector<64x1xf32>
    %14 = math.rsqrt %13 : vector<64x1xf32>
    %15 = vector.broadcast %14 : vector<64x1xf32> to vector<64x128xf32>
    %16 = arith.mulf %6, %15 : vector<64x128xf32>
    %c0_5 = arith.constant 0 : index
    %c0_6 = arith.constant 0 : index
    %17 = vector.load %arg2[%c0_5, %c0_6] : memref<1x128xf32, #tpu.memory_space<vmem>>, vector<1x128xf32>
    %18 = vector.broadcast %17 : vector<1x128xf32> to vector<64x128xf32>
    %19 = arith.mulf %16, %18 : vector<64x128xf32>
    %c0_7 = arith.constant 0 : index
    %c0_8 = arith.constant 0 : index
    %20 = vector.load %arg3[%c0_7, %c0_8] : memref<1x128xf32, #tpu.memory_space<vmem>>, vector<1x128xf32>
    %21 = vector.broadcast %20 : vector<1x128xf32> to vector<64x128xf32>
    %22 = arith.addf %19, %21 : vector<64x128xf32>
    %c0_9 = arith.constant 0 : index
    %c0_10 = arith.constant 0 : index
    %23 = vector.load %arg4[%c0_9, %c0_10] : memref<128x384xf32, #tpu.memory_space<vmem>>, vector<128x384xf32>
    %cst_11 = arith.constant dense<0.000000e+00> : vector<64x384xf32>
    %24 = tpu.matmul %22, %23, %cst_11 {dimension_numbers = #tpu.dot_dimension_numbers<[1], [0], [0], [1], [0, 0, 1, 1], [], []>} : vector<64x128xf32>, vector<128x384xf32>, vector<64x384xf32> -> vector<64x384xf32>
    %c0_12 = arith.constant 0 : index
    %c0_13 = arith.constant 0 : index
    %25 = vector.load %arg5[%c0_12, %c0_13] : memref<1x384xf32, #tpu.memory_space<vmem>>, vector<1x384xf32>
    %26 = vector.broadcast %25 : vector<1x384xf32> to vector<64x384xf32>
    %27 = arith.addf %24, %26 : vector<64x384xf32>
    %c0_14 = arith.constant 0 : index
    %c0_15 = arith.constant 0 : index
    %28 = vector.load %arg6[%c0_14, %c0_15] : memref<64x384xf32, #tpu.memory_space<vmem>>, vector<64x384xf32>
    tpu.vector_store %arg6[%c0_14, %c0_15], %27 {strides = array<i32>} : memref<64x384xf32, #tpu.memory_space<vmem>>, vector<64x384xf32>,
    return
  }
  func.func @transform_0(%arg0: i32) -> (i32, i32) {
    %c0_i32 = arith.constant 0 : i32
    %c0_i32_0 = arith.constant 0 : i32
    return %arg0, %c0_i32 : i32, i32
  }
  func.func @transform_1(%arg0: i32) -> (i32, i32) {
    %c0_i32 = arith.constant 0 : i32
    %c0_i32_0 = arith.constant 0 : i32
    %c0_i32_1 = arith.constant 0 : i32
    return %c0_i32, %c0_i32_0 : i32, i32
  }
  func.func @transform_2(%arg0: i32) -> (i32, i32) {
    %c0_i32 = arith.constant 0 : i32
    %c0_i32_0 = arith.constant 0 : i32
    %c0_i32_1 = arith.constant 0 : i32
    return %c0_i32, %c0_i32_0 : i32, i32
  }
  func.func @transform_3(%arg0: i32) -> (i32, i32) {
    %c0_i32 = arith.constant 0 : i32
    %c0_i32_0 = arith.constant 0 : i32
    %c0_i32_1 = arith.constant 0 : i32
    return %c0_i32, %c0_i32_0 : i32, i32
  }
  func.func @transform_4(%arg0: i32) -> (i32, i32) {
    %c0_i32 = arith.constant 0 : i32
    %c0_i32_0 = arith.constant 0 : i32
    %c0_i32_1 = arith.constant 0 : i32
    return %c0_i32, %c0_i32_0 : i32, i32
  }
  func.func @transform_5(%arg0: i32) -> (i32, i32) {
    %c0_i32 = arith.constant 0 : i32
    %c0_i32_0 = arith.constant 0 : i32
    return %arg0, %c0_i32 : i32, i32
  }
}

module attributes {stable_mosaic.version = 11 : i64} {
  func.func @_ln_matmul_kernel(%arg0: i32, %arg1: memref<64x128xf32, #tpu.memory_space<vmem>>, %arg2: memref<1x128xf32, #tpu.memory_space<vmem>>, %arg3: memref<1x128xf32, #tpu.memory_space<vmem>>, %arg4: memref<128x384xf32, #tpu.memory_space<vmem>>, %arg5: memref<1x384xf32, #tpu.memory_space<vmem>>, %arg6: memref<64x384xf32, #tpu.memory_space<vmem>>) attributes {dimension_semantics = [#tpu.dimension_semantics<parallel>], iteration_bounds = array<i64: 1>, scalar_prefetch = 0 : i64, scratch_operands = 0 : i64, tpu.core_type = #tpu.core_type<tc>, window_params = [{transform_indices = @transform_0, window_bounds = array<i64: 64, 128>}, {pipeline_mode = #tpu.pipeline_mode<synchronous>, transform_indices = @transform_1, window_bounds = array<i64: 1, 128>}, {pipeline_mode = #tpu.pipeline_mode<synchronous>, transform_indices = @transform_2, window_bounds = array<i64: 1, 128>}, {pipeline_mode = #tpu.pipeline_mode<synchronous>, transform_indices = @transform_3, window_bounds = array<i64: 128, 384>}, {pipeline_mode = #tpu.pipeline_mode<synchronous>, transform_indices = @transform_4, window_bounds = array<i64: 1, 384>}, {transform_indices = @transform_5, window_bounds = array<i64: 64, 384>}]} {
    %c0 = arith.constant 0 : index
    %c0_0 = arith.constant 0 : index
    %0 = vector.load %arg1[%c0, %c0_0] : memref<64x128xf32, #tpu.memory_space<vmem>>, vector<64x128xf32>
    %cst = arith.constant dense<0.000000e+00> : vector<64xf32>
    %1 = vector.multi_reduction <add>, %0, %cst [1] : vector<64x128xf32> to vector<64xf32>
    %2 = vector.shape_cast %1 : vector<64xf32> to vector<64x1xf32>
    %cst_1 = arith.constant 1.280000e+02 : f32
    %3 = vector.broadcast %cst_1 : f32 to vector<64x1xf32>
    %4 = arith.divf %2, %3 : vector<64x1xf32>
    %5 = vector.broadcast %4 : vector<64x1xf32> to vector<64x128xf32>
    %6 = arith.subf %0, %5 : vector<64x128xf32>
    %7 = arith.mulf %6, %6 : vector<64x128xf32>
    %cst_2 = arith.constant dense<0.000000e+00> : vector<64xf32>
    %8 = vector.multi_reduction <add>, %7, %cst_2 [1] : vector<64x128xf32> to vector<64xf32>
    %9 = vector.shape_cast %8 : vector<64xf32> to vector<64x1xf32>
    %cst_3 = arith.constant 1.280000e+02 : f32
    %10 = vector.broadcast %cst_3 : f32 to vector<64x1xf32>
    %11 = arith.divf %9, %10 : vector<64x1xf32>
    %cst_4 = arith.constant 9.99999974E-6 : f32
    %12 = vector.broadcast %cst_4 : f32 to vector<64x1xf32>
    %13 = arith.addf %11, %12 : vector<64x1xf32>
    %14 = math.rsqrt %13 : vector<64x1xf32>
    %15 = vector.broadcast %14 : vector<64x1xf32> to vector<64x128xf32>
    %16 = arith.mulf %6, %15 : vector<64x128xf32>
    %c0_5 = arith.constant 0 : index
    %c0_6 = arith.constant 0 : index
    %17 = vector.load %arg2[%c0_5, %c0_6] : memref<1x128xf32, #tpu.memory_space<vmem>>, vector<1x128xf32>
    %18 = vector.broadcast %17 : vector<1x128xf32> to vector<64x128xf32>
    %19 = arith.mulf %16, %18 : vector<64x128xf32>
    %c0_7 = arith.constant 0 : index
    %c0_8 = arith.constant 0 : index
    %20 = vector.load %arg3[%c0_7, %c0_8] : memref<1x128xf32, #tpu.memory_space<vmem>>, vector<1x128xf32>
    %21 = vector.broadcast %20 : vector<1x128xf32> to vector<64x128xf32>
    %22 = arith.addf %19, %21 : vector<64x128xf32>
    %c0_9 = arith.constant 0 : index
    %c0_10 = arith.constant 0 : index
    %23 = vector.load %arg4[%c0_9, %c0_10] : memref<128x384xf32, #tpu.memory_space<vmem>>, vector<128x384xf32>
    %cst_11 = arith.constant dense<0.000000e+00> : vector<64x384xf32>
    %24 = tpu.matmul %22, %23, %cst_11 {dimension_numbers = #tpu.dot_dimension_numbers<[1], [0], [0], [1], [0, 0, 1, 1], [], []>} : vector<64x128xf32>, vector<128x384xf32>, vector<64x384xf32> -> vector<64x384xf32>
    %c0_12 = arith.constant 0 : index
    %c0_13 = arith.constant 0 : index
    %25 = vector.load %arg5[%c0_12, %c0_13] : memref<1x384xf32, #tpu.memory_space<vmem>>, vector<1x384xf32>
    %26 = vector.broadcast %25 : vector<1x384xf32> to vector<64x384xf32>
    %27 = arith.addf %24, %26 : vector<64x384xf32>
    %c0_14 = arith.constant 0 : index
    %c0_15 = arith.constant 0 : index
    %28 = vector.load %arg6[%c0_14, %c0_15] : memref<64x384xf32, #tpu.memory_space<vmem>>, vector<64x384xf32>
    tpu.vector_store %arg6[%c0_14, %c0_15], %27 {strides = array<i32>} : memref<64x384xf32, #tpu.memory_space<vmem>>, vector<64x384xf32>,
    return
  }
  func.func @transform_0(%arg0: i32) -> (i32, i32) {
    %c0_i32 = arith.constant 0 : i32
    %c0_i32_0 = arith.constant 0 : i32
    return %arg0, %c0_i32 : i32, i32
  }
  func.func @transform_1(%arg0: i32) -> (i32, i32) {
    %c0_i32 = arith.constant 0 : i32
    %c0_i32_0 = arith.constant 0 : i32
    %c0_i32_1 = arith.constant 0 : i32
    return %c0_i32, %c0_i32_0 : i32, i32
  }
  func.func @transform_2(%arg0: i32) -> (i32, i32) {
    %c0_i32 = arith.constant 0 : i32
    %c0_i32_0 = arith.constant 0 : i32
    %c0_i32_1 = arith.constant 0 : i32
    return %c0_i32, %c0_i32_0 : i32, i32
  }
  func.func @transform_3(%arg0: i32) -> (i32, i32) {
    %c0_i32 = arith.constant 0 : i32
    %c0_i32_0 = arith.constant 0 : i32
    %c0_i32_1 = arith.constant 0 : i32
    return %c0_i32, %c0_i32_0 : i32, i32
  }
  func.func @transform_4(%arg0: i32) -> (i32, i32) {
    %c0_i32 = arith.constant 0 : i32
    %c0_i32_0 = arith.constant 0 : i32
    %c0_i32_1 = arith.constant 0 : i32
    return %c0_i32, %c0_i32_0 : i32, i32
  }
  func.func @transform_5(%arg0: i32) -> (i32, i32) {
    %c0_i32 = arith.constant 0 : i32
    %c0_i32_0 = arith.constant 0 : i32
    return %arg0, %c0_i32 : i32, i32
  }
}

</mosaic_0001>

<llo_original>
// kernel: tpu_custom_call.1
$region0: #{tpu_custom_call.1}
  #allocation0 [shape = 'u32[]', space=smem, size = 0x4, offset = 0x4, fixed_abs, tag = 'smem constant byte address 0x4 - core index']
  #allocation1 [shape = 'u32[144,128]{1,0:T(1,128)}', space=vmem, size = 0x12000, scoped, tag = 'internal scratch']
  %s0 = inlined_call_operand.hbm [shape: f32[64,128], index: 0, kind: input, shape index: {}]
  %s1 = inlined_call_operand.vmem [shape: f32[1,128], index: 1, kind: input, shape index: {}]
  %s2 = inlined_call_operand.vmem [shape: f32[1,128], index: 2, kind: input, shape index: {}]
  %s3 = inlined_call_operand.hbm [shape: f32[128,384], index: 3, kind: input, shape index: {}]
  %s4 = inlined_call_operand.vmem [shape: f32[1,384], index: 4, kind: input, shape index: {}]
  %s5 = inlined_call_operand.hbm [shape: f32[64,384], index: 5, kind: output, shape index: {}]
  %s6 = sld [smem:[#allocation0]]
  $region38: #{tpu_custom_call.1} parent=0
    _
  %s8 = ssub.s32 1, %s6
  %s9 = scalar_select 0, %s8, %s6
  $region1: #{tpu_custom_call.1} parent=0
    #allocation2 [shape = 'u8[32768]{0}', space=vmem, size = 0x8000, scoped, tag = 'input window, operand 0, single buffered']
    #allocation3 [shape = 's32[1]{0}', space=sflag, size = 0x4, scoped, tag = 'scoped memory for tpu_custom_call.1']
    #allocation4 [shape = 's32[1]{0}', space=sflag, size = 0x4, scoped, tag = 'scoped memory for tpu_custom_call.1']
    #allocation5 [shape = 'u8[196608]{0}', space=vmem, size = 0x30000, scoped, tag = 'input window, operand 3, single buffered']
    #allocation6 [shape = 's32[1]{0}', space=sflag, size = 0x4, scoped, tag = 'scoped memory for tpu_custom_call.1']
    #allocation7 [shape = 'u8[98304]{0}', space=vmem, size = 0x18000, scoped, tag = 'output window, operand 0, single buffered']
    %10 = vsyncpa [#allocation3], 0
    %11 = vsyncpa [#allocation6], 0
    %12 = vsyncpa [#allocation4], 0
    // Predicated region
    $region2: #{tpu_custom_call.1} parent=1 // pred_check
      _
    $region3: #{tpu_custom_call.1} parent=1 // pred_check_branch
      %14 = sbr.rel (0) target = $region5
    $region4: #{tpu_custom_call.1} parent=1 // pred_region
      %s16 = ssub.s32 1024, 1024
      %17 = vsyncadd [#allocation3], %s16
      %s18 = sshll.u32 [#allocation2], 4
      %s19 = int_to_ptr.vmem [resolvable:$true] %s18
      %24 = dma.hbm_to_vmem [thread:$0]  %s0, 1024, %s19, [#allocation3], 128, 128, 8
    $region5: #{tpu_custom_call.1} parent=1 // pred_fallthru
      _
    // Predicated region
    $region6: #{tpu_custom_call.1} parent=1 // pred_check
      _
    $region7: #{tpu_custom_call.1} parent=1 // pred_check_branch
      %26 = sbr.rel (0) target = $region9
    $region8: #{tpu_custom_call.1} parent=1 // pred_region
      _
    $region9: #{tpu_custom_call.1} parent=1 // pred_fallthru
      _
    // Predicated region
    $region10: #{tpu_custom_call.1} parent=1 // pred_check
      _
    $region11: #{tpu_custom_call.1} parent=1 // pred_check_branch
      %28 = sbr.rel (0) target = $region13
    $region12: #{tpu_custom_call.1} parent=1 // pred_region
      _
    $region13: #{tpu_custom_call.1} parent=1 // pred_fallthru
      _
    // Predicated region
    $region14: #{tpu_custom_call.1} parent=1 // pred_check
      _
    $region15: #{tpu_custom_call.1} parent=1 // pred_check_branch
      %30 = sbr.rel (0) target = $region17
    $region16: #{tpu_custom_call.1} parent=1 // pred_region
      %s32 = ssub.s32 6144, 6144
      %33 = vsyncadd [#allocation6], %s32
      %s34 = sshll.u32 [#allocation5], 4
      %s35 = int_to_ptr.vmem [resolvable:$true] %s34
      %40 = dma.hbm_to_vmem [thread:$0]  %s3, 6144, %s35, [#allocation6], 384, 384, 24
    $region17: #{tpu_custom_call.1} parent=1 // pred_fallthru
      _
    // Predicated region
    $region18: #{tpu_custom_call.1} parent=1 // pred_check
      _
    $region19: #{tpu_custom_call.1} parent=1 // pred_check_branch
      %42 = sbr.rel (0) target = $region21
    $region20: #{tpu_custom_call.1} parent=1 // pred_region
      _
    $region21: #{tpu_custom_call.1} parent=1 // pred_fallthru
      _
    // Predicated region
    $region22: #{tpu_custom_call.1} parent=1 // pred_check
      _
    $region23: #{tpu_custom_call.1} parent=1 // pred_check_branch
      %44 = sbr.rel (0) target = $region25
    $region24: #{tpu_custom_call.1} parent=1 // pred_region
      %45 = dma.done [#allocation3], 1024
    $region25: #{tpu_custom_call.1} parent=1 // pred_fallthru
      _
    // Predicated region
    $region26: #{tpu_custom_call.1} parent=1 // pred_check
      _
    $region27: #{tpu_custom_call.1} parent=1 // pred_check_branch
      %47 = sbr.rel (0) target = $region29
    $region28: #{tpu_custom_call.1} parent=1 // pred_region
      %48 = dma.done [#allocation6], 6144
    $region29: #{tpu_custom_call.1} parent=1 // pred_fallthru
      _
    %v49 = vld [vmem:[#allocation2] sm:$0xff]
    %v50 = vld [vmem:[#allocation2 + $0x8] sm:$0xff]
    %v51 = vld [vmem:[#allocation2 + $0x10] sm:$0xff]
    %v52 = vld [vmem:[#allocation2 + $0x18] sm:$0xff]
    %v53 = vld [vmem:[#allocation2 + $0x20] sm:$0xff]
    %v54 = vld [vmem:[#allocation2 + $0x28] sm:$0xff]
    %v55 = vld [vmem:[#allocation2 + $0x30] sm:$0xff]
    %v56 = vld [vmem:[#allocation2 + $0x38] sm:$0xff]
    %57 = vadd.xlane.f32.xlu0 %v49
    %v58 = vpop.xlane.xlu0 %57
    %59 = vadd.xlane.f32.xlu0 %v50
    %v60 = vpop.xlane.xlu0 %59
    %61 = vadd.xlane.f32.xlu0 %v51
    %v62 = vpop.xlane.xlu0 %61
    %63 = vadd.xlane.f32.xlu0 %v52
    %v64 = vpop.xlane.xlu0 %63
    %65 = vadd.xlane.f32.xlu0 %v53
    %v66 = vpop.xlane.xlu0 %65
    %67 = vadd.xlane.f32.xlu0 %v54
    %v68 = vpop.xlane.xlu0 %67
    %69 = vadd.xlane.f32.xlu0 %v55
    %v70 = vpop.xlane.xlu0 %69
    %71 = vadd.xlane.f32.xlu0 %v56
    %v72 = vpop.xlane.xlu0 %71
    %v73 = vrcp.pop 128.0
    %v74 = vmul.f32 %v58, %v73
    %v75 = vmul.f32 %v60, %v73
    %v76 = vmul.f32 %v62, %v73
    %v77 = vmul.f32 %v64, %v73
    %v78 = vmul.f32 %v66, %v73
    %v79 = vmul.f32 %v68, %v73
    %v80 = vmul.f32 %v70, %v73
    %v81 = vmul.f32 %v72, %v73
    %v82 = vsub.f32 %v49, %v74
    %v83 = vsub.f32 %v50, %v75
    %v84 = vsub.f32 %v51, %v76
    %v85 = vsub.f32 %v52, %v77
    %v86 = vsub.f32 %v53, %v78
    %v87 = vsub.f32 %v54, %v79
    %v88 = vsub.f32 %v55, %v80
    %v89 = vsub.f32 %v56, %v81
    %v90 = vmul.f32 %v82, %v82
    %v91 = vmul.f32 %v83, %v83
    %v92 = vmul.f32 %v84, %v84
    %v93 = vmul.f32 %v85, %v85
    %v94 = vmul.f32 %v86, %v86
    %v95 = vmul.f32 %v87, %v87
    %v96 = vmul.f32 %v88, %v88
    %v97 = vmul.f32 %v89, %v89
    %98 = vadd.xlane.f32.xlu0 %v90
    %v99 = vpop.xlane.xlu0 %98
    %100 = vadd.xlane.f32.xlu0 %v91
    %v101 = vpop.xlane.xlu0 %100
    %102 = vadd.xlane.f32.xlu0 %v92
    %v103 = vpop.xlane.xlu0 %102
    %104 = vadd.xlane.f32.xlu0 %v93
    %v105 = vpop.xlane.xlu0 %104
    %106 = vadd.xlane.f32.xlu0 %v94
    %v107 = vpop.xlane.xlu0 %106
    %108 = vadd.xlane.f32.xlu0 %v95
    %v109 = vpop.xlane.xlu0 %108
    %110 = vadd.xlane.f32.xlu0 %v96
    %v111 = vpop.xlane.xlu0 %110
    %112 = vadd.xlane.f32.xlu0 %v97
    %v113 = vpop.xlane.xlu0 %112
    %v114 = vmul.f32 %v99, %v73
    %v115 = vmul.f32 %v101, %v73
    %v116 = vmul.f32 %v103, %v73
    %v117 = vmul.f32 %v105, %v73
    %v118 = vmul.f32 %v107, %v73
    %v119 = vmul.f32 %v109, %v73
    %v120 = vmul.f32 %v111, %v73
    %v121 = vmul.f32 %v113, %v73
    %v122 = vadd.f32 %v114, 1e-05
    %v123 = vadd.f32 %v115, 1e-05
    %v124 = vadd.f32 %v116, 1e-05
    %v125 = vadd.f32 %v117, 1e-05
    %v126 = vadd.f32 %v118, 1e-05
    %v127 = vadd.f32 %v119, 1e-05
    %v128 = vadd.f32 %v120, 1e-05
    %v129 = vadd.f32 %v121, 1e-05
    %v130 = vrsqrt.pop %v122
    %v131 = vrsqrt.pop %v123
    %v132 = vrsqrt.pop %v124
    %v133 = vrsqrt.pop %v125
    %v134 = vrsqrt.pop %v126
    %v135 = vrsqrt.pop %v127
    %v136 = vrsqrt.pop %v128
    %v137 = vrsqrt.pop %v129
    %v138 = vmul.f32 %v82, %v130
    %v139 = vmul.f32 %v83, %v131
    %v140 = vmul.f32 %v84, %v132
    %v141 = vmul.f32 %v85, %v133
    %v142 = vmul.f32 %v86, %v134
    %v143 = vmul.f32 %v87, %v135
    %v144 = vmul.f32 %v88, %v136
    %v145 = vmul.f32 %v89, %v137
    %v146 = vld [vmem:[%s1] sm:$0x1]
    %v148 = vlaneseq
    %v149 = vshrl.u32 %v148, 7
    %v150 = vsub.s32 0, %v149
    %v151 = vrot.slane %v146, %v150
    %v153 = vmul.f32 %v138, %v151
    %v154 = vmul.f32 %v139, %v151
    %v155 = vmul.f32 %v140, %v151
    %v156 = vmul.f32 %v141, %v151
    %v157 = vmul.f32 %v142, %v151
    %v158 = vmul.f32 %v143, %v151
    %v159 = vmul.f32 %v144, %v151
    %v160 = vmul.f32 %v145, %v151
    %v161 = vld [vmem:[%s2] sm:$0x1]
    %v163 = vlaneseq
    %v164 = vshrl.u32 %v163, 7
    %v165 = vsub.s32 0, %v164
    %v166 = vrot.slane %v161, %v165
    %v168 = vadd.f32 %v153, %v166
    %v169 = vadd.f32 %v154, %v166
    %v170 = vadd.f32 %v155, %v166
    %v171 = vadd.f32 %v156, %v166
    %v172 = vadd.f32 %v157, %v166
    %v173 = vadd.f32 %v158, %v166
    %v174 = vadd.f32 %v159, %v166
    %v175 = vadd.f32 %v160, %v166
    %v176 = vld [vmem:[#allocation5] sm:$0xff]
    %v177 = vld [vmem:[#allocation5 + $0x8] sm:$0xff]
    %v178 = vld [vmem:[#allocation5 + $0x10] sm:$0xff]
    %v179 = vld [vmem:[#allocation5 + $0x18] sm:$0xff]
    %v180 = vld [vmem:[#allocation5 + $0x20] sm:$0xff]
    %v181 = vld [vmem:[#allocation5 + $0x28] sm:$0xff]
    %v182 = vld [vmem:[#allocation5 + $0x30] sm:$0xff]
    %v183 = vld [vmem:[#allocation5 + $0x38] sm:$0xff]
    %v184 = vld [vmem:[#allocation5 + $0x40] sm:$0xff]
    %v185 = vld [vmem:[#allocation5 + $0x48] sm:$0xff]
    %v186 = vld [vmem:[#allocation5 + $0x50] sm:$0xff]
    %v187 = vld [vmem:[#allocation5 + $0x58] sm:$0xff]
    %v188 = vld [vmem:[#allocation5 + $0x60] sm:$0xff]
    %v189 = vld [vmem:[#allocation5 + $0x68] sm:$0xff]
    %v190 = vld [vmem:[#allocation5 + $0x70] sm:$0xff]
    %v191 = vld [vmem:[#allocation5 + $0x78] sm:$0xff]
    %v192 = vld [vmem:[#allocation5 + $0x80] sm:$0xff]
    %v193 = vld [vmem:[#allocation5 + $0x88] sm:$0xff]
    %v194 = vld [vmem:[#allocation5 + $0x90] sm:$0xff]
    %v195 = vld [vmem:[#allocation5 + $0x98] sm:$0xff]
    %v196 = vld [vmem:[#allocation5 + $0xa0] sm:$0xff]
    %v197 = vld [vmem:[#allocation5 + $0xa8] sm:$0xff]
    %v198 = vld [vmem:[#allocation5 + $0xb0] sm:$0xff]
    %v199 = vld [vmem:[#allocation5 + $0xb8] sm:$0xff]
    %v200 = vld [vmem:[#allocation5 + $0xc0] sm:$0xff]
    %v201 = vld [vmem:[#allocation5 + $0xc8] sm:$0xff]
    %v202 = vld [vmem:[#allocation5 + $0xd0] sm:$0xff]
    %v203 = vld [vmem:[#allocation5 + $0xd8] sm:$0xff]
    %v204 = vld [vmem:[#allocation5 + $0xe0] sm:$0xff]
    %v205 = vld [vmem:[#allocation5 + $0xe8] sm:$0xff]
    %v206 = vld [vmem:[#allocation5 + $0xf0] sm:$0xff]
    %v207 = vld [vmem:[#allocation5 + $0xf8] sm:$0xff]
    %v208 = vld [vmem:[#allocation5 + $0x100] sm:$0xff]
    %v209 = vld [vmem:[#allocation5 + $0x108] sm:$0xff]
    %v210 = vld [vmem:[#allocation5 + $0x110] sm:$0xff]
    %v211 = vld [vmem:[#allocation5 + $0x118] sm:$0xff]
    %v212 = vld [vmem:[#allocation5 + $0x120] sm:$0xff]
    %v213 = vld [vmem:[#allocation5 + $0x128] sm:$0xff]
    %v214 = vld [vmem:[#allocation5 + $0x130] sm:$0xff]
    %v215 = vld [vmem:[#allocation5 + $0x138] sm:$0xff]
    %v216 = vld [vmem:[#allocation5 + $0x140] sm:$0xff]
    %v217 = vld [vmem:[#allocation5 + $0x148] sm:$0xff]
    %v218 = vld [vmem:[#allocation5 + $0x150] sm:$0xff]
    %v219 = vld [vmem:[#allocation5 + $0x158] sm:$0xff]
    %v220 = vld [vmem:[#allocation5 + $0x160] sm:$0xff]
    %v221 = vld [vmem:[#allocation5 + $0x168] sm:$0xff]
    %v222 = vld [vmem:[#allocation5 + $0x170] sm:$0xff]
    %v223 = vld [vmem:[#allocation5 + $0x178] sm:$0xff]
    %v224 = vld [vmem:[%s4] sm:$0x7]
    %v226 = vlaneseq
    %v227 = vshrl.u32 %v226, 7
    %v228 = vsub.s32 0, %v227
    %v229 = vrot.slane %v224, %v228
    %v230 = vlaneseq
    %v231 = vshrl.u32 %v230, 7
    %v232 = vsub.s32 1, %v231
    %v233 = vrot.slane %v224, %v232
    %v234 = vlaneseq
    %v235 = vshrl.u32 %v234, 7
    %v236 = vsub.s32 2, %v235
    %v237 = vrot.slane %v224, %v236
    %241 = vmatprep.subr.mxu0 %v222
    %242 = vmatpush1.msra.mxu0 %v221
    %243 = vmatprep.subr.mxu0 %v219
    %244 = vmatpush1.msra.mxu0 %v218
    %245 = vmatprep.subr.mxu0 %v216
    %246 = vmatpush1.msra.mxu0 %v215
    %247 = vmatprep.subr.mxu0 %v213
    %248 = vmatpush1.msra.mxu0 %v212
    %249 = vmatprep.subr.mxu0 %v210
    %250 = vmatpush1.msra.mxu0 %v209
    %251 = vmatprep.subr.mxu0 %v207
    %252 = vmatpush1.msra.mxu0 %v206
    %253 = vmatprep.subr.mxu0 %v204
    %254 = vmatpush1.msra.mxu0 %v203
    %255 = vmatprep.subr.mxu0 %v201
    %256 = vmatpush1.msra.mxu0 %v200
    %257 = vmatprep.subr.mxu0 %v198
    %258 = vmatpush1.msra.mxu0 %v197
    %259 = vmatprep.subr.mxu0 %v195
    %260 = vmatpush1.msra.mxu0 %v194
    %261 = vmatprep.subr.mxu0 %v192
    %262 = vmatpush1.msra.mxu0 %v191
    %263 = vmatprep.subr.mxu0 %v189
    %264 = vmatpush1.msra.mxu0 %v188
    %265 = vmatprep.subr.mxu0 %v186
    %266 = vmatpush1.msra.mxu0 %v185
    %267 = vmatprep.subr.mxu0 %v183
    %268 = vmatpush1.msra.mxu0 %v182
    %269 = vmatprep.subr.mxu0 %v180
    %270 = vmatpush1.msra.mxu0 %v179
    %271 = vmatprep.subr.mxu0 %v177
    %272 = vmatpush1.msra.mxu0 %v176
    %273 = vmatprep.subr.mxu0 0.0
    %274 = vmatpush2.msra.mxu0 0.0
    %275 = vmatprep.subr.mxu0 0.0
    %276 = vmatpush2.msra.mxu0 0.0
    %277 = vmatprep.subr.mxu0 0.0
    %278 = vmatpush2.msra.mxu0 0.0
    %279 = vmatprep.subr.mxu0 0.0
    %280 = vmatpush2.msra.mxu0 0.0
    %281 = vmatprep.subr.mxu0 0.0
    %282 = vmatpush2.msra.mxu0 0.0
    %283 = vmatprep.subr.mxu0 0.0
    %284 = vmatpush2.msra.mxu0 0.0
    %285 = vmatprep.subr.mxu0 0.0
    %286 = vmatpush2.msra.mxu0 0.0
    %287 = vmatprep.subr.mxu0 0.0
    %288 = vmatpush2.msra.mxu0 0.0
    %289 = vmatprep.subr.mxu0 0.0
    %290 = vmatpush2.msra.mxu0 0.0
    %291 = vmatprep.subr.mxu0 0.0
    %292 = vmatpush2.msra.mxu0 0.0
    %293 = vmatprep.subr.mxu0 0.0
    %294 = vmatpush2.msra.mxu0 0.0
    %295 = vmatprep.subr.mxu0 0.0
    %296 = vmatpush2.msra.mxu0 0.0
    %297 = vmatprep.subr.mxu0 0.0
    %298 = vmatpush2.msra.mxu0 0.0
    %299 = vmatprep.subr.mxu0 0.0
    %300 = vmatpush2.msra.mxu0 0.0
    %301 = vmatprep.subr.mxu0 0.0
    %302 = vmatpush2.msra.mxu0 0.0
    %303 = vmatprep.subr.mxu0 0.0
    %304 = vmatpush2.msra.mxu0 0.0
    %305 = vmatprep.mubr.f32.mxu0 0.0
    %306 = vmatmul.mubr.f32.gmra.mxu0 %v168
    %v307 = vpop.f32.mrf.mxu0
    %v308 = vadd.f32 %v229, %v307
    %v309 = vpop.f32.mrf.mxu0
    %v310 = vadd.f32 %v233, %v309
    %311 = vmatprep.mubr.f32.mxu0 0.0
    %312 = vmatmul.mubr.f32.gmra.mxu0 %v169
    %v313 = vpop.f32.mrf.mxu0
    %v314 = vadd.f32 %v229, %v313
    %v315 = vpop.f32.mrf.mxu0
    %v316 = vadd.f32 %v233, %v315
    %317 = vmatprep.mubr.f32.mxu0 0.0
    %318 = vmatmul.mubr.f32.gmra.mxu0 %v170
    %v319 = vpop.f32.mrf.mxu0
    %v320 = vadd.f32 %v229, %v319
    %v321 = vpop.f32.mrf.mxu0
    %v322 = vadd.f32 %v233, %v321
    %323 = vmatprep.mubr.f32.mxu0 0.0
    %324 = vmatmul.mubr.f32.gmra.mxu0 %v171
    %v325 = vpop.f32.mrf.mxu0
    %v326 = vadd.f32 %v229, %v325
    %v327 = vpop.f32.mrf.mxu0
    %v328 = vadd.f32 %v233, %v327
    %329 = vmatprep.mubr.f32.mxu0 0.0
    %330 = vmatmul.mubr.f32.gmra.mxu0 %v172
    %v331 = vpop.f32.mrf.mxu0
    %v332 = vadd.f32 %v229, %v331
    %v333 = vpop.f32.mrf.mxu0
    %v334 = vadd.f32 %v233, %v333
    %335 = vmatprep.mubr.f32.mxu0 0.0
    %336 = vmatmul.mubr.f32.gmra.mxu0 %v173
    %v337 = vpop.f32.mrf.mxu0
    %v338 = vadd.f32 %v229, %v337
    %v339 = vpop.f32.mrf.mxu0
    %v340 = vadd.f32 %v233, %v339
    %341 = vmatprep.mubr.f32.mxu0 0.0
    %342 = vmatmul.mubr.f32.gmra.mxu0 %v174
    %v343 = vpop.f32.mrf.mxu0
    %v344 = vadd.f32 %v229, %v343
    %v345 = vpop.f32.mrf.mxu0
    %v346 = vadd.f32 %v233, %v345
    %347 = vmatprep.mubr.f32.mxu0 0.0
    %348 = vmatmul.mubr.f32.gmra.mxu0 %v175
    %v349 = vpop.f32.mrf.mxu0
    %v350 = vadd.f32 %v229, %v349
    %v351 = vpop.f32.mrf.mxu0
    %v352 = vadd.f32 %v233, %v351
    %353 = vdwg.mxu0
    %354 = vmatprep.subr.mxu0 0.0
    %355 = vmatpush1.msra.mxu0 %v223
    %356 = vmatprep.subr.mxu0 0.0
    %357 = vmatpush1.msra.mxu0 %v220
    %358 = vmatprep.subr.mxu0 0.0
    %359 = vmatpush1.msra.mxu0 %v217
    %360 = vmatprep.subr.mxu0 0.0
    %361 = vmatpush1.msra.mxu0 %v214
    %362 = vmatprep.subr.mxu0 0.0
    %363 = vmatpush1.msra.mxu0 %v211
    %364 = vmatprep.subr.mxu0 0.0
    %365 = vmatpush1.msra.mxu0 %v208
    %366 = vmatprep.subr.mxu0 0.0
    %367 = vmatpush1.msra.mxu0 %v205
    %368 = vmatprep.subr.mxu0 0.0
    %369 = vmatpush1.msra.mxu0 %v202
    %370 = vmatprep.subr.mxu0 0.0
    %371 = vmatpush1.msra.mxu0 %v199
    %372 = vmatprep.subr.mxu0 0.0
    %373 = vmatpush1.msra.mxu0 %v196
    %374 = vmatprep.subr.mxu0 0.0
    %375 = vmatpush1.msra.mxu0 %v193
    %376 = vmatprep.subr.mxu0 0.0
    %377 = vmatpush1.msra.mxu0 %v190
    %378 = vmatprep.subr.mxu0 0.0
    %379 = vmatpush1.msra.mxu0 %v187
    %380 = vmatprep.subr.mxu0 0.0
    %381 = vmatpush1.msra.mxu0 %v184
    %382 = vmatprep.subr.mxu0 0.0
    %383 = vmatpush1.msra.mxu0 %v181
    %384 = vmatprep.subr.mxu0 0.0
    %385 = vmatpush1.msra.mxu0 %v178
    %386 = vmatprep.subr.mxu0 0.0
    %387 = vmatpush2.msra.mxu0 0.0
    %388 = vmatprep.subr.mxu0 0.0
    %389 = vmatpush2.msra.mxu0 0.0
    %390 = vmatprep.subr.mxu0 0.0
    %391 = vmatpush2.msra.mxu0 0.0
    %392 = vmatprep.subr.mxu0 0.0
    %393 = vmatpush2.msra.mxu0 0.0
    %394 = vmatprep.subr.mxu0 0.0
    %395 = vmatpush2.msra.mxu0 0.0
    %396 = vmatprep.subr.mxu0 0.0
    %397 = vmatpush2.msra.mxu0 0.0
    %398 = vmatprep.subr.mxu0 0.0
    %399 = vmatpush2.msra.mxu0 0.0
    %400 = vmatprep.subr.mxu0 0.0
    %401 = vmatpush2.msra.mxu0 0.0
    %402 = vmatprep.subr.mxu0 0.0
    %403 = vmatpush2.msra.mxu0 0.0
    %404 = vmatprep.subr.mxu0 0.0
    %405 = vmatpush2.msra.mxu0 0.0
    %406 = vmatprep.subr.mxu0 0.0
    %407 = vmatpush2.msra.mxu0 0.0
    %408 = vmatprep.subr.mxu0 0.0
    %409 = vmatpush2.msra.mxu0 0.0
    %410 = vmatprep.subr.mxu0 0.0
    %411 = vmatpush2.msra.mxu0 0.0
    %412 = vmatprep.subr.mxu0 0.0
    %413 = vmatpush2.msra.mxu0 0.0
    %414 = vmatprep.subr.mxu0 0.0
    %415 = vmatpush2.msra.mxu0 0.0
    %416 = vmatprep.subr.mxu0 0.0
    %417 = vmatpush2.msra.mxu0 0.0
    %418 = vmatprep.mubr.f32.mxu0 0.0
    %419 = vmatmul.mubr.f32.gmra.mxu0 %v168
    %v420 = vpop.f32.mrf.mxu0
    %v421 = vadd.f32 %v237, %v420
    %v422 = vpop.f32.mrf.mxu0
    %423 = vmatprep.mubr.f32.mxu0 0.0
    %424 = vmatmul.mubr.f32.gmra.mxu0 %v169
    %v425 = vpop.f32.mrf.mxu0
    %v426 = vadd.f32 %v237, %v425
    %v427 = vpop.f32.mrf.mxu0
    %428 = vmatprep.mubr.f32.mxu0 0.0
    %429 = vmatmul.mubr.f32.gmra.mxu0 %v170
    %v430 = vpop.f32.mrf.mxu0
    %v431 = vadd.f32 %v237, %v430
    %v432 = vpop.f32.mrf.mxu0
    %433 = vmatprep.mubr.f32.mxu0 0.0
    %434 = vmatmul.mubr.f32.gmra.mxu0 %v171
    %v435 = vpop.f32.mrf.mxu0
    %v436 = vadd.f32 %v237, %v435
    %v437 = vpop.f32.mrf.mxu0
    %438 = vmatprep.mubr.f32.mxu0 0.0
    %439 = vmatmul.mubr.f32.gmra.mxu0 %v172
    %v440 = vpop.f32.mrf.mxu0
    %v441 = vadd.f32 %v237, %v440
    %v442 = vpop.f32.mrf.mxu0
    %443 = vmatprep.mubr.f32.mxu0 0.0
    %444 = vmatmul.mubr.f32.gmra.mxu0 %v173
    %v445 = vpop.f32.mrf.mxu0
    %v446 = vadd.f32 %v237, %v445
    %v447 = vpop.f32.mrf.mxu0
    %448 = vmatprep.mubr.f32.mxu0 0.0
    %449 = vmatmul.mubr.f32.gmra.mxu0 %v174
    %v450 = vpop.f32.mrf.mxu0
    %v451 = vadd.f32 %v237, %v450
    %v452 = vpop.f32.mrf.mxu0
    %453 = vmatprep.mubr.f32.mxu0 0.0
    %454 = vmatmul.mubr.f32.gmra.mxu0 %v175
    %v455 = vpop.f32.mrf.mxu0
    %v456 = vadd.f32 %v237, %v455
    %v457 = vpop.f32.mrf.mxu0
    %458 = vdwg.mxu0
    %459 = vst [vmem:[#allocation7] sm:$0xff] %v308
    %460 = vst [vmem:[#allocation7 + $0x8] sm:$0xff] %v310
    %461 = vst [vmem:[#allocation7 + $0x10] sm:$0xff] %v421
    %462 = vst [vmem:[#allocation7 + $0x18] sm:$0xff] %v314
    %463 = vst [vmem:[#allocation7 + $0x20] sm:$0xff] %v316
    %464 = vst [vmem:[#allocation7 + $0x28] sm:$0xff] %v426
    %465 = vst [vmem:[#allocation7 + $0x30] sm:$0xff] %v320
    %466 = vst [vmem:[#allocation7 + $0x38] sm:$0xff] %v322
    %467 = vst [vmem:[#allocation7 + $0x40] sm:$0xff] %v431
    %468 = vst [vmem:[#allocation7 + $0x48] sm:$0xff] %v326
    %469 = vst [vmem:[#allocation7 + $0x50] sm:$0xff] %v328
    %470 = vst [vmem:[#allocation7 + $0x58] sm:$0xff] %v436
    %471 = vst [vmem:[#allocation7 + $0x60] sm:$0xff] %v332
    %472 = vst [vmem:[#allocation7 + $0x68] sm:$0xff] %v334
    %473 = vst [vmem:[#allocation7 + $0x70] sm:$0xff] %v441
    %474 = vst [vmem:[#allocation7 + $0x78] sm:$0xff] %v338
    %475 = vst [vmem:[#allocation7 + $0x80] sm:$0xff] %v340
    %476 = vst [vmem:[#allocation7 + $0x88] sm:$0xff] %v446
    %477 = vst [vmem:[#allocation7 + $0x90] sm:$0xff] %v344
    %478 = vst [vmem:[#allocation7 + $0x98] sm:$0xff] %v346
    %479 = vst [vmem:[#allocation7 + $0xa0] sm:$0xff] %v451
    %480 = vst [vmem:[#allocation7 + $0xa8] sm:$0xff] %v350
    %481 = vst [vmem:[#allocation7 + $0xb0] sm:$0xff] %v352
    %482 = vst [vmem:[#allocation7 + $0xb8] sm:$0xff] %v456
    // Predicated region
    $region30: #{tpu_custom_call.1} parent=1 // pred_check
      _
    $region31: #{tpu_custom_call.1} parent=1 // pred_check_branch
      %484 = sbr.rel (0) target = $region33
    $region32: #{tpu_custom_call.1} parent=1 // pred_region
      %s486 = ssub.s32 3072, 3072
      %487 = vsyncadd [#allocation4], %s486
      %s488 = sshll.u32 [#allocation7], 4
      %s489 = int_to_ptr.vmem [resolvable:$true] %s488
      %494 = dma.vmem_to_hbm [thread:$0]  %s489, 3072, %s5, [#allocation4], 384, 384, 24
    $region33: #{tpu_custom_call.1} parent=1 // pred_fallthru
      _
    // Predicated region
    $region34: #{tpu_custom_call.1} parent=1 // pred_check
      _
    $region35: #{tpu_custom_call.1} parent=1 // pred_check_branch
      %496 = sbr.rel (0) target = $region37
    $region36: #{tpu_custom_call.1} parent=1 // pred_region
      %497 = dma.done [#allocation4], 3072
    $region37: #{tpu_custom_call.1} parent=1 // pred_fallthru
      _
    %498 = vsyncpa [#allocation3], 1
    %499 = vsyncpa [#allocation6], 1
    %500 = vsyncpa [#allocation4], 1

// kernel: tpu_custom_call.1
$region0: #{tpu_custom_call.1}
  #allocation0 [shape = 'u32[]', space=smem, size = 0x4, offset = 0x4, fixed_abs, tag = 'smem constant byte address 0x4 - core index']
  #allocation1 [shape = 'u32[144,128]{1,0:T(1,128)}', space=vmem, size = 0x12000, scoped, tag = 'internal scratch']
  %s0 = inlined_call_operand.hbm [shape: f32[64,128], index: 0, kind: input, shape index: {}]
  %s1 = inlined_call_operand.vmem [shape: f32[1,128], index: 1, kind: input, shape index: {}]
  %s2 = inlined_call_operand.vmem [shape: f32[1,128], index: 2, kind: input, shape index: {}]
  %s3 = inlined_call_operand.hbm [shape: f32[128,384], index: 3, kind: input, shape index: {}]
  %s4 = inlined_call_operand.vmem [shape: f32[1,384], index: 4, kind: input, shape index: {}]
  %s5 = inlined_call_operand.hbm [shape: f32[64,384], index: 5, kind: output, shape index: {}]
  %s6 = sld [smem:[#allocation0]]
  $region38: #{tpu_custom_call.1} parent=0
    _
  %s8 = ssub.s32 1, %s6
  %s9 = scalar_select 0, %s8, %s6
  $region1: #{tpu_custom_call.1} parent=0
    #allocation2 [shape = 'u8[32768]{0}', space=vmem, size = 0x8000, scoped, tag = 'input window, operand 0, single buffered']
    #allocation3 [shape = 's32[1]{0}', space=sflag, size = 0x4, scoped, tag = 'scoped memory for tpu_custom_call.1']
    #allocation4 [shape = 's32[1]{0}', space=sflag, size = 0x4, scoped, tag = 'scoped memory for tpu_custom_call.1']
    #allocation5 [shape = 'u8[196608]{0}', space=vmem, size = 0x30000, scoped, tag = 'input window, operand 3, single buffered']
    #allocation6 [shape = 's32[1]{0}', space=sflag, size = 0x4, scoped, tag = 'scoped memory for tpu_custom_call.1']
    #allocation7 [shape = 'u8[98304]{0}', space=vmem, size = 0x18000, scoped, tag = 'output window, operand 0, single buffered']
    %10 = vsyncpa [#allocation3], 0
    %11 = vsyncpa [#allocation6], 0
    %12 = vsyncpa [#allocation4], 0
    // Predicated region
    $region2: #{tpu_custom_call.1} parent=1 // pred_check
      _
    $region3: #{tpu_custom_call.1} parent=1 // pred_check_branch
      %14 = sbr.rel (0) target = $region5
    $region4: #{tpu_custom_call.1} parent=1 // pred_region
      %s16 = ssub.s32 1024, 1024
      %17 = vsyncadd [#allocation3], %s16
      %s18 = sshll.u32 [#allocation2], 4
      %s19 = int_to_ptr.vmem [resolvable:$true] %s18
      %24 = dma.hbm_to_vmem [thread:$0]  %s0, 1024, %s19, [#allocation3], 128, 128, 8
    $region5: #{tpu_custom_call.1} parent=1 // pred_fallthru
      _
    // Predicated region
    $region6: #{tpu_custom_call.1} parent=1 // pred_check
      _
    $region7: #{tpu_custom_call.1} parent=1 // pred_check_branch
      %26 = sbr.rel (0) target = $region9
    $region8: #{tpu_custom_call.1} parent=1 // pred_region
      _
    $region9: #{tpu_custom_call.1} parent=1 // pred_fallthru
      _
    // Predicated region
    $region10: #{tpu_custom_call.1} parent=1 // pred_check
      _
    $region11: #{tpu_custom_call.1} parent=1 // pred_check_branch
      %28 = sbr.rel (0) target = $region13
    $region12: #{tpu_custom_call.1} parent=1 // pred_region
      _
    $region13: #{tpu_custom_call.1} parent=1 // pred_fallthru
      _
    // Predicated region
    $region14: #{tpu_custom_call.1} parent=1 // pred_check
      _
    $region15: #{tpu_custom_call.1} parent=1 // pred_check_branch
      %30 = sbr.rel (0) target = $region17
    $region16: #{tpu_custom_call.1} parent=1 // pred_region
      %s32 = ssub.s32 6144, 6144
      %33 = vsyncadd [#allocation6], %s32
      %s34 = sshll.u32 [#allocation5], 4
      %s35 = int_to_ptr.vmem [resolvable:$true] %s34
      %40 = dma.hbm_to_vmem [thread:$0]  %s3, 6144, %s35, [#allocation6], 384, 384, 24
    $region17: #{tpu_custom_call.1} parent=1 // pred_fallthru
      _
    // Predicated region
    $region18: #{tpu_custom_call.1} parent=1 // pred_check
      _
    $region19: #{tpu_custom_call.1} parent=1 // pred_check_branch
      %42 = sbr.rel (0) target = $region21
    $region20: #{tpu_custom_call.1} parent=1 // pred_region
      _
    $region21: #{tpu_custom_call.1} parent=1 // pred_fallthru
      _
    // Predicated region
    $region22: #{tpu_custom_call.1} parent=1 // pred_check
      _
    $region23: #{tpu_custom_call.1} parent=1 // pred_check_branch
      %44 = sbr.rel (0) target = $region25
    $region24: #{tpu_custom_call.1} parent=1 // pred_region
      %45 = dma.done [#allocation3], 1024
    $region25: #{tpu_custom_call.1} parent=1 // pred_fallthru
      _
    // Predicated region
    $region26: #{tpu_custom_call.1} parent=1 // pred_check
      _
    $region27: #{tpu_custom_call.1} parent=1 // pred_check_branch
      %47 = sbr.rel (0) target = $region29
    $region28: #{tpu_custom_call.1} parent=1 // pred_region
      %48 = dma.done [#allocation6], 6144
    $region29: #{tpu_custom_call.1} parent=1 // pred_fallthru
      _
    %v49 = vld [vmem:[#allocation2] sm:$0xff]
    %v50 = vld [vmem:[#allocation2 + $0x8] sm:$0xff]
    %v51 = vld [vmem:[#allocation2 + $0x10] sm:$0xff]
    %v52 = vld [vmem:[#allocation2 + $0x18] sm:$0xff]
    %v53 = vld [vmem:[#allocation2 + $0x20] sm:$0xff]
    %v54 = vld [vmem:[#allocation2 + $0x28] sm:$0xff]
    %v55 = vld [vmem:[#allocation2 + $0x30] sm:$0xff]
    %v56 = vld [vmem:[#allocation2 + $0x38] sm:$0xff]
    %57 = vadd.xlane.f32.xlu0 %v49
    %v58 = vpop.xlane.xlu0 %57
    %59 = vadd.xlane.f32.xlu0 %v50
    %v60 = vpop.xlane.xlu0 %59
    %61 = vadd.xlane.f32.xlu0 %v51
    %v62 = vpop.xlane.xlu0 %61
    %63 = vadd.xlane.f32.xlu0 %v52
    %v64 = vpop.xlane.xlu0 %63
    %65 = vadd.xlane.f32.xlu0 %v53
    %v66 = vpop.xlane.xlu0 %65
    %67 = vadd.xlane.f32.xlu0 %v54
    %v68 = vpop.xlane.xlu0 %67
    %69 = vadd.xlane.f32.xlu0 %v55
    %v70 = vpop.xlane.xlu0 %69
    %71 = vadd.xlane.f32.xlu0 %v56
    %v72 = vpop.xlane.xlu0 %71
    %v73 = vrcp.pop 128.0
    %v74 = vmul.f32 %v58, %v73
    %v75 = vmul.f32 %v60, %v73
    %v76 = vmul.f32 %v62, %v73
    %v77 = vmul.f32 %v64, %v73
    %v78 = vmul.f32 %v66, %v73
    %v79 = vmul.f32 %v68, %v73
    %v80 = vmul.f32 %v70, %v73
    %v81 = vmul.f32 %v72, %v73
    %v82 = vsub.f32 %v49, %v74
    %v83 = vsub.f32 %v50, %v75
    %v84 = vsub.f32 %v51, %v76
    %v85 = vsub.f32 %v52, %v77
    %v86 = vsub.f32 %v53, %v78
    %v87 = vsub.f32 %v54, %v79
    %v88 = vsub.f32 %v55, %v80
    %v89 = vsub.f32 %v56, %v81
    %v90 = vmul.f32 %v82, %v82
    %v91 = vmul.f32 %v83, %v83
    %v92 = vmul.f32 %v84, %v84
    %v93 = vmul.f32 %v85, %v85
    %v94 = vmul.f32 %v86, %v86
    %v95 = vmul.f32 %v87, %v87
    %v96 = vmul.f32 %v88, %v88
    %v97 = vmul.f32 %v89, %v89
    %98 = vadd.xlane.f32.xlu0 %v90
    %v99 = vpop.xlane.xlu0 %98
    %100 = vadd.xlane.f32.xlu0 %v91
    %v101 = vpop.xlane.xlu0 %100
    %102 = vadd.xlane.f32.xlu0 %v92
    %v103 = vpop.xlane.xlu0 %102
    %104 = vadd.xlane.f32.xlu0 %v93
    %v105 = vpop.xlane.xlu0 %104
    %106 = vadd.xlane.f32.xlu0 %v94
    %v107 = vpop.xlane.xlu0 %106
    %108 = vadd.xlane.f32.xlu0 %v95
    %v109 = vpop.xlane.xlu0 %108
    %110 = vadd.xlane.f32.xlu0 %v96
    %v111 = vpop.xlane.xlu0 %110
    %112 = vadd.xlane.f32.xlu0 %v97
    %v113 = vpop.xlane.xlu0 %112
    %v114 = vmul.f32 %v99, %v73
    %v115 = vmul.f32 %v101, %v73
    %v116 = vmul.f32 %v103, %v73
    %v117 = vmul.f32 %v105, %v73
    %v118 = vmul.f32 %v107, %v73
    %v119 = vmul.f32 %v109, %v73
    %v120 = vmul.f32 %v111, %v73
    %v121 = vmul.f32 %v113, %v73
    %v122 = vadd.f32 %v114, 1e-05
    %v123 = vadd.f32 %v115, 1e-05
    %v124 = vadd.f32 %v116, 1e-05
    %v125 = vadd.f32 %v117, 1e-05
    %v126 = vadd.f32 %v118, 1e-05
    %v127 = vadd.f32 %v119, 1e-05
    %v128 = vadd.f32 %v120, 1e-05
    %v129 = vadd.f32 %v121, 1e-05
    %v130 = vrsqrt.pop %v122
    %v131 = vrsqrt.pop %v123
    %v132 = vrsqrt.pop %v124
    %v133 = vrsqrt.pop %v125
    %v134 = vrsqrt.pop %v126
    %v135 = vrsqrt.pop %v127
    %v136 = vrsqrt.pop %v128
    %v137 = vrsqrt.pop %v129
    %v138 = vmul.f32 %v82, %v130
    %v139 = vmul.f32 %v83, %v131
    %v140 = vmul.f32 %v84, %v132
    %v141 = vmul.f32 %v85, %v133
    %v142 = vmul.f32 %v86, %v134
    %v143 = vmul.f32 %v87, %v135
    %v144 = vmul.f32 %v88, %v136
    %v145 = vmul.f32 %v89, %v137
    %v146 = vld [vmem:[%s1] sm:$0x1]
    %v148 = vlaneseq
    %v149 = vshrl.u32 %v148, 7
    %v150 = vsub.s32 0, %v149
    %v151 = vrot.slane %v146, %v150
    %v153 = vmul.f32 %v138, %v151
    %v154 = vmul.f32 %v139, %v151
    %v155 = vmul.f32 %v140, %v151
    %v156 = vmul.f32 %v141, %v151
    %v157 = vmul.f32 %v142, %v151
    %v158 = vmul.f32 %v143, %v151
    %v159 = vmul.f32 %v144, %v151
    %v160 = vmul.f32 %v145, %v151
    %v161 = vld [vmem:[%s2] sm:$0x1]
    %v163 = vlaneseq
    %v164 = vshrl.u32 %v163, 7
    %v165 = vsub.s32 0, %v164
    %v166 = vrot.slane %v161, %v165
    %v168 = vadd.f32 %v153, %v166
    %v169 = vadd.f32 %v154, %v166
    %v170 = vadd.f32 %v155, %v166
    %v171 = vadd.f32 %v156, %v166
    %v172 = vadd.f32 %v157, %v166
    %v173 = vadd.f32 %v158, %v166
    %v174 = vadd.f32 %v159, %v166
    %v175 = vadd.f32 %v160, %v166
    %v176 = vld [vmem:[#allocation5] sm:$0xff]
    %v177 = vld [vmem:[#allocation5 + $0x8] sm:$0xff]
    %v178 = vld [vmem:[#allocation5 + $0x10] sm:$0xff]
    %v179 = vld [vmem:[#allocation5 + $0x18] sm:$0xff]
    %v180 = vld [vmem:[#allocation5 + $0x20] sm:$0xff]
    %v181 = vld [vmem:[#allocation5 + $0x28] sm:$0xff]
    %v182 = vld [vmem:[#allocation5 + $0x30] sm:$0xff]
    %v183 = vld [vmem:[#allocation5 + $0x38] sm:$0xff]
    %v184 = vld [vmem:[#allocation5 + $0x40] sm:$0xff]
    %v185 = vld [vmem:[#allocation5 + $0x48] sm:$0xff]
    %v186 = vld [vmem:[#allocation5 + $0x50] sm:$0xff]
    %v187 = vld [vmem:[#allocation5 + $0x58] sm:$0xff]
    %v188 = vld [vmem:[#allocation5 + $0x60] sm:$0xff]
    %v189 = vld [vmem:[#allocation5 + $0x68] sm:$0xff]
    %v190 = vld [vmem:[#allocation5 + $0x70] sm:$0xff]
    %v191 = vld [vmem:[#allocation5 + $0x78] sm:$0xff]
    %v192 = vld [vmem:[#allocation5 + $0x80] sm:$0xff]
    %v193 = vld [vmem:[#allocation5 + $0x88] sm:$0xff]
    %v194 = vld [vmem:[#allocation5 + $0x90] sm:$0xff]
    %v195 = vld [vmem:[#allocation5 + $0x98] sm:$0xff]
    %v196 = vld [vmem:[#allocation5 + $0xa0] sm:$0xff]
    %v197 = vld [vmem:[#allocation5 + $0xa8] sm:$0xff]
    %v198 = vld [vmem:[#allocation5 + $0xb0] sm:$0xff]
    %v199 = vld [vmem:[#allocation5 + $0xb8] sm:$0xff]
    %v200 = vld [vmem:[#allocation5 + $0xc0] sm:$0xff]
    %v201 = vld [vmem:[#allocation5 + $0xc8] sm:$0xff]
    %v202 = vld [vmem:[#allocation5 + $0xd0] sm:$0xff]
    %v203 = vld [vmem:[#allocation5 + $0xd8] sm:$0xff]
    %v204 = vld [vmem:[#allocation5 + $0xe0] sm:$0xff]
    %v205 = vld [vmem:[#allocation5 + $0xe8] sm:$0xff]
    %v206 = vld [vmem:[#allocation5 + $0xf0] sm:$0xff]
    %v207 = vld [vmem:[#allocation5 + $0xf8] sm:$0xff]
    %v208 = vld [vmem:[#allocation5 + $0x100] sm:$0xff]
    %v209 = vld [vmem:[#allocation5 + $0x108] sm:$0xff]
    %v210 = vld [vmem:[#allocation5 + $0x110] sm:$0xff]
    %v211 = vld [vmem:[#allocation5 + $0x118] sm:$0xff]
    %v212 = vld [vmem:[#allocation5 + $0x120] sm:$0xff]
    %v213 = vld [vmem:[#allocation5 + $0x128] sm:$0xff]
    %v214 = vld [vmem:[#allocation5 + $0x130] sm:$0xff]
    %v215 = vld [vmem:[#allocation5 + $0x138] sm:$0xff]
    %v216 = vld [vmem:[#allocation5 + $0x140] sm:$0xff]
    %v217 = vld [vmem:[#allocation5 + $0x148] sm:$0xff]
    %v218 = vld [vmem:[#allocation5 + $0x150] sm:$0xff]
    %v219 = vld [vmem:[#allocation5 + $0x158] sm:$0xff]
    %v220 = vld [vmem:[#allocation5 + $0x160] sm:$0xff]
    %v221 = vld [vmem:[#allocation5 + $0x168] sm:$0xff]
    %v222 = vld [vmem:[#allocation5 + $0x170] sm:$0xff]
    %v223 = vld [vmem:[#allocation5 + $0x178] sm:$0xff]
    %v224 = vld [vmem:[%s4] sm:$0x7]
    %v226 = vlaneseq
    %v227 = vshrl.u32 %v226, 7
    %v228 = vsub.s32 0, %v227
    %v229 = vrot.slane %v224, %v228
    %v230 = vlaneseq
    %v231 = vshrl.u32 %v230, 7
    %v232 = vsub.s32 1, %v231
    %v233 = vrot.slane %v224, %v232
    %v234 = vlaneseq
    %v235 = vshrl.u32 %v234, 7
    %v236 = vsub.s32 2, %v235
    %v237 = vrot.slane %v224, %v236
    %241 = vmatprep.subr.mxu0 %v222
    %242 = vmatpush1.msra.mxu0 %v221
    %243 = vmatprep.subr.mxu0 %v219
    %244 = vmatpush1.msra.mxu0 %v218
    %245 = vmatprep.subr.mxu0 %v216
    %246 = vmatpush1.msra.mxu0 %v215
    %247 = vmatprep.subr.mxu0 %v213
    %248 = vmatpush1.msra.mxu0 %v212
    %249 = vmatprep.subr.mxu0 %v210
    %250 = vmatpush1.msra.mxu0 %v209
    %251 = vmatprep.subr.mxu0 %v207
    %252 = vmatpush1.msra.mxu0 %v206
    %253 = vmatprep.subr.mxu0 %v204
    %254 = vmatpush1.msra.mxu0 %v203
    %255 = vmatprep.subr.mxu0 %v201
    %256 = vmatpush1.msra.mxu0 %v200
    %257 = vmatprep.subr.mxu0 %v198
    %258 = vmatpush1.msra.mxu0 %v197
    %259 = vmatprep.subr.mxu0 %v195
    %260 = vmatpush1.msra.mxu0 %v194
    %261 = vmatprep.subr.mxu0 %v192
    %262 = vmatpush1.msra.mxu0 %v191
    %263 = vmatprep.subr.mxu0 %v189
    %264 = vmatpush1.msra.mxu0 %v188
    %265 = vmatprep.subr.mxu0 %v186
    %266 = vmatpush1.msra.mxu0 %v185
    %267 = vmatprep.subr.mxu0 %v183
    %268 = vmatpush1.msra.mxu0 %v182
    %269 = vmatprep.subr.mxu0 %v180
    %270 = vmatpush1.msra.mxu0 %v179
    %271 = vmatprep.subr.mxu0 %v177
    %272 = vmatpush1.msra.mxu0 %v176
    %273 = vmatprep.subr.mxu0 0.0
    %274 = vmatpush2.msra.mxu0 0.0
    %275 = vmatprep.subr.mxu0 0.0
    %276 = vmatpush2.msra.mxu0 0.0
    %277 = vmatprep.subr.mxu0 0.0
    %278 = vmatpush2.msra.mxu0 0.0
    %279 = vmatprep.subr.mxu0 0.0
    %280 = vmatpush2.msra.mxu0 0.0
    %281 = vmatprep.subr.mxu0 0.0
    %282 = vmatpush2.msra.mxu0 0.0
    %283 = vmatprep.subr.mxu0 0.0
    %284 = vmatpush2.msra.mxu0 0.0
    %285 = vmatprep.subr.mxu0 0.0
    %286 = vmatpush2.msra.mxu0 0.0
    %287 = vmatprep.subr.mxu0 0.0
    %288 = vmatpush2.msra.mxu0 0.0
    %289 = vmatprep.subr.mxu0 0.0
    %290 = vmatpush2.msra.mxu0 0.0
    %291 = vmatprep.subr.mxu0 0.0
    %292 = vmatpush2.msra.mxu0 0.0
    %293 = vmatprep.subr.mxu0 0.0
    %294 = vmatpush2.msra.mxu0 0.0
    %295 = vmatprep.subr.mxu0 0.0
    %296 = vmatpush2.msra.mxu0 0.0
    %297 = vmatprep.subr.mxu0 0.0
    %298 = vmatpush2.msra.mxu0 0.0
    %299 = vmatprep.subr.mxu0 0.0
    %300 = vmatpush2.msra.mxu0 0.0
    %301 = vmatprep.subr.mxu0 0.0
    %302 = vmatpush2.msra.mxu0 0.0
    %303 = vmatprep.subr.mxu0 0.0
    %304 = vmatpush2.msra.mxu0 0.0
    %305 = vmatprep.mubr.f32.mxu0 0.0
    %306 = vmatmul.mubr.f32.gmra.mxu0 %v168
    %v307 = vpop.f32.mrf.mxu0
    %v308 = vadd.f32 %v229, %v307
    %v309 = vpop.f32.mrf.mxu0
    %v310 = vadd.f32 %v233, %v309
    %311 = vmatprep.mubr.f32.mxu0 0.0
    %312 = vmatmul.mubr.f32.gmra.mxu0 %v169
    %v313 = vpop.f32.mrf.mxu0
    %v314 = vadd.f32 %v229, %v313
    %v315 = vpop.f32.mrf.mxu0
    %v316 = vadd.f32 %v233, %v315
    %317 = vmatprep.mubr.f32.mxu0 0.0
    %318 = vmatmul.mubr.f32.gmra.mxu0 %v170
    %v319 = vpop.f32.mrf.mxu0
    %v320 = vadd.f32 %v229, %v319
    %v321 = vpop.f32.mrf.mxu0
    %v322 = vadd.f32 %v233, %v321
    %323 = vmatprep.mubr.f32.mxu0 0.0
    %324 = vmatmul.mubr.f32.gmra.mxu0 %v171
    %v325 = vpop.f32.mrf.mxu0
    %v326 = vadd.f32 %v229, %v325
    %v327 = vpop.f32.mrf.mxu0
    %v328 = vadd.f32 %v233, %v327
    %329 = vmatprep.mubr.f32.mxu0 0.0
    %330 = vmatmul.mubr.f32.gmra.mxu0 %v172
    %v331 = vpop.f32.mrf.mxu0
    %v332 = vadd.f32 %v229, %v331
    %v333 = vpop.f32.mrf.mxu0
    %v334 = vadd.f32 %v233, %v333
    %335 = vmatprep.mubr.f32.mxu0 0.0
    %336 = vmatmul.mubr.f32.gmra.mxu0 %v173
    %v337 = vpop.f32.mrf.mxu0
    %v338 = vadd.f32 %v229, %v337
    %v339 = vpop.f32.mrf.mxu0
    %v340 = vadd.f32 %v233, %v339
    %341 = vmatprep.mubr.f32.mxu0 0.0
    %342 = vmatmul.mubr.f32.gmra.mxu0 %v174
    %v343 = vpop.f32.mrf.mxu0
    %v344 = vadd.f32 %v229, %v343
    %v345 = vpop.f32.mrf.mxu0
    %v346 = vadd.f32 %v233, %v345
    %347 = vmatprep.mubr.f32.mxu0 0.0
    %348 = vmatmul.mubr.f32.gmra.mxu0 %v175
    %v349 = vpop.f32.mrf.mxu0
    %v350 = vadd.f32 %v229, %v349
    %v351 = vpop.f32.mrf.mxu0
    %v352 = vadd.f32 %v233, %v351
    %353 = vdwg.mxu0
    %354 = vmatprep.subr.mxu0 0.0
    %355 = vmatpush1.msra.mxu0 %v223
    %356 = vmatprep.subr.mxu0 0.0
    %357 = vmatpush1.msra.mxu0 %v220
    %358 = vmatprep.subr.mxu0 0.0
    %359 = vmatpush1.msra.mxu0 %v217
    %360 = vmatprep.subr.mxu0 0.0
    %361 = vmatpush1.msra.mxu0 %v214
    %362 = vmatprep.subr.mxu0 0.0
    %363 = vmatpush1.msra.mxu0 %v211
    %364 = vmatprep.subr.mxu0 0.0
    %365 = vmatpush1.msra.mxu0 %v208
    %366 = vmatprep.subr.mxu0 0.0
    %367 = vmatpush1.msra.mxu0 %v205
    %368 = vmatprep.subr.mxu0 0.0
    %369 = vmatpush1.msra.mxu0 %v202
    %370 = vmatprep.subr.mxu0 0.0
    %371 = vmatpush1.msra.mxu0 %v199
    %372 = vmatprep.subr.mxu0 0.0
    %373 = vmatpush1.msra.mxu0 %v196
    %374 = vmatprep.subr.mxu0 0.0
    %375 = vmatpush1.msra.mxu0 %v193
    %376 = vmatprep.subr.mxu0 0.0
    %377 = vmatpush1.msra.mxu0 %v190
    %378 = vmatprep.subr.mxu0 0.0
    %379 = vmatpush1.msra.mxu0 %v187
    %380 = vmatprep.subr.mxu0 0.0
    %381 = vmatpush1.msra.mxu0 %v184
    %382 = vmatprep.subr.mxu0 0.0
    %383 = vmatpush1.msra.mxu0 %v181
    %384 = vmatprep.subr.mxu0 0.0
    %385 = vmatpush1.msra.mxu0 %v178
    %386 = vmatprep.subr.mxu0 0.0
    %387 = vmatpush2.msra.mxu0 0.0
    %388 = vmatprep.subr.mxu0 0.0
    %389 = vmatpush2.msra.mxu0 0.0
    %390 = vmatprep.subr.mxu0 0.0
    %391 = vmatpush2.msra.mxu0 0.0
    %392 = vmatprep.subr.mxu0 0.0
    %393 = vmatpush2.msra.mxu0 0.0
    %394 = vmatprep.subr.mxu0 0.0
    %395 = vmatpush2.msra.mxu0 0.0
    %396 = vmatprep.subr.mxu0 0.0
    %397 = vmatpush2.msra.mxu0 0.0
    %398 = vmatprep.subr.mxu0 0.0
    %399 = vmatpush2.msra.mxu0 0.0
    %400 = vmatprep.subr.mxu0 0.0
    %401 = vmatpush2.msra.mxu0 0.0
    %402 = vmatprep.subr.mxu0 0.0
    %403 = vmatpush2.msra.mxu0 0.0
    %404 = vmatprep.subr.mxu0 0.0
    %405 = vmatpush2.msra.mxu0 0.0
    %406 = vmatprep.subr.mxu0 0.0
    %407 = vmatpush2.msra.mxu0 0.0
    %408 = vmatprep.subr.mxu0 0.0
    %409 = vmatpush2.msra.mxu0 0.0
    %410 = vmatprep.subr.mxu0 0.0
    %411 = vmatpush2.msra.mxu0 0.0
    %412 = vmatprep.subr.mxu0 0.0
    %413 = vmatpush2.msra.mxu0 0.0
    %414 = vmatprep.subr.mxu0 0.0
    %415 = vmatpush2.msra.mxu0 0.0
    %416 = vmatprep.subr.mxu0 0.0
    %417 = vmatpush2.msra.mxu0 0.0
    %418 = vmatprep.mubr.f32.mxu0 0.0
    %419 = vmatmul.mubr.f32.gmra.mxu0 %v168
    %v420 = vpop.f32.mrf.mxu0
    %v421 = vadd.f32 %v237, %v420
    %v422 = vpop.f32.mrf.mxu0
    %423 = vmatprep.mubr.f32.mxu0 0.0
    %424 = vmatmul.mubr.f32.gmra.mxu0 %v169
    %v425 = vpop.f32.mrf.mxu0
    %v426 = vadd.f32 %v237, %v425
    %v427 = vpop.f32.mrf.mxu0
    %428 = vmatprep.mubr.f32.mxu0 0.0
    %429 = vmatmul.mubr.f32.gmra.mxu0 %v170
    %v430 = vpop.f32.mrf.mxu0
    %v431 = vadd.f32 %v237, %v430
    %v432 = vpop.f32.mrf.mxu0
    %433 = vmatprep.mubr.f32.mxu0 0.0
    %434 = vmatmul.mubr.f32.gmra.mxu0 %v171
    %v435 = vpop.f32.mrf.mxu0
    %v436 = vadd.f32 %v237, %v435
    %v437 = vpop.f32.mrf.mxu0
    %438 = vmatprep.mubr.f32.mxu0 0.0
    %439 = vmatmul.mubr.f32.gmra.mxu0 %v172
    %v440 = vpop.f32.mrf.mxu0
    %v441 = vadd.f32 %v237, %v440
    %v442 = vpop.f32.mrf.mxu0
    %443 = vmatprep.mubr.f32.mxu0 0.0
    %444 = vmatmul.mubr.f32.gmra.mxu0 %v173
    %v445 = vpop.f32.mrf.mxu0
    %v446 = vadd.f32 %v237, %v445
    %v447 = vpop.f32.mrf.mxu0
    %448 = vmatprep.mubr.f32.mxu0 0.0
    %449 = vmatmul.mubr.f32.gmra.mxu0 %v174
    %v450 = vpop.f32.mrf.mxu0
    %v451 = vadd.f32 %v237, %v450
    %v452 = vpop.f32.mrf.mxu0
    %453 = vmatprep.mubr.f32.mxu0 0.0
    %454 = vmatmul.mubr.f32.gmra.mxu0 %v175
    %v455 = vpop.f32.mrf.mxu0
    %v456 = vadd.f32 %v237, %v455
    %v457 = vpop.f32.mrf.mxu0
    %458 = vdwg.mxu0
    %459 = vst [vmem:[#allocation7] sm:$0xff] %v308
    %460 = vst [vmem:[#allocation7 + $0x8] sm:$0xff] %v310
    %461 = vst [vmem:[#allocation7 + $0x10] sm:$0xff] %v421
    %462 = vst [vmem:[#allocation7 + $0x18] sm:$0xff] %v314
    %463 = vst [vmem:[#allocation7 + $0x20] sm:$0xff] %v316
    %464 = vst [vmem:[#allocation7 + $0x28] sm:$0xff] %v426
    %465 = vst [vmem:[#allocation7 + $0x30] sm:$0xff] %v320
    %466 = vst [vmem:[#allocation7 + $0x38] sm:$0xff] %v322
    %467 = vst [vmem:[#allocation7 + $0x40] sm:$0xff] %v431
    %468 = vst [vmem:[#allocation7 + $0x48] sm:$0xff] %v326
    %469 = vst [vmem:[#allocation7 + $0x50] sm:$0xff] %v328
    %470 = vst [vmem:[#allocation7 + $0x58] sm:$0xff] %v436
    %471 = vst [vmem:[#allocation7 + $0x60] sm:$0xff] %v332
    %472 = vst [vmem:[#allocation7 + $0x68] sm:$0xff] %v334
    %473 = vst [vmem:[#allocation7 + $0x70] sm:$0xff] %v441
    %474 = vst [vmem:[#allocation7 + $0x78] sm:$0xff] %v338
    %475 = vst [vmem:[#allocation7 + $0x80] sm:$0xff] %v340
    %476 = vst [vmem:[#allocation7 + $0x88] sm:$0xff] %v446
    %477 = vst [vmem:[#allocation7 + $0x90] sm:$0xff] %v344
    %478 = vst [vmem:[#allocation7 + $0x98] sm:$0xff] %v346
    %479 = vst [vmem:[#allocation7 + $0xa0] sm:$0xff] %v451
    %480 = vst [vmem:[#allocation7 + $0xa8] sm:$0xff] %v350
    %481 = vst [vmem:[#allocation7 + $0xb0] sm:$0xff] %v352
    %482 = vst [vmem:[#allocation7 + $0xb8] sm:$0xff] %v456
    // Predicated region
    $region30: #{tpu_custom_call.1} parent=1 // pred_check
      _
    $region31: #{tpu_custom_call.1} parent=1 // pred_check_branch
      %484 = sbr.rel (0) target = $region33
    $region32: #{tpu_custom_call.1} parent=1 // pred_region
      %s486 = ssub.s32 3072, 3072
      %487 = vsyncadd [#allocation4], %s486
      %s488 = sshll.u32 [#allocation7], 4
      %s489 = int_to_ptr.vmem [resolvable:$true] %s488
      %494 = dma.vmem_to_hbm [thread:$0]  %s489, 3072, %s5, [#allocation4], 384, 384, 24
    $region33: #{tpu_custom_call.1} parent=1 // pred_fallthru
      _
    // Predicated region
    $region34: #{tpu_custom_call.1} parent=1 // pred_check
      _
    $region35: #{tpu_custom_call.1} parent=1 // pred_check_branch
      %496 = sbr.rel (0) target = $region37
    $region36: #{tpu_custom_call.1} parent=1 // pred_region
      %497 = dma.done [#allocation4], 3072
    $region37: #{tpu_custom_call.1} parent=1 // pred_fallthru
      _
    %498 = vsyncpa [#allocation3], 1
    %499 = vsyncpa [#allocation6], 1
    %500 = vsyncpa [#allocation4], 1

</llo_original>
